<compile_context>
chip_gen: v6e
topology: v6e:2x2x1
jax: 0.10.0
libtpu: 0.0.40
codegen_flags: <defaults>
</compile_context>

<pallas_src>
import jax
import jax.numpy as jnp
from jax.experimental import pallas as pl
from jax.experimental.pallas import tpu as pltpu


def _round_up(x, m):
    return (x + m - 1) // m * m


def _choose_tm(M, K, E_pad, in_bytes, out_bytes, budget=12 << 20, tm_max=4096):
    """Largest power-of-two-ish TM (multiple of 256) whose double-buffered
    tiles + resident weight fit a conservative cross-generation VMEM budget."""
    tm, best = 256, 256
    while tm <= tm_max:
        need = (2 * tm * K * in_bytes          # patches tile, double-buffered
                + 2 * tm * E_pad * out_bytes   # output tile, double-buffered
                + K * E_pad * in_bytes         # resident weight
                + 2 * E_pad * 4)               # resident bias
        if need > budget:
            break
        best, tm = tm, tm * 2
    if M <= best:
        # Single grid step: shrink the tile to the (8-aligned) problem size so
        # small problems carry no padding overhang at all.
        return max(8, _round_up(M, 8))
    return best


def _patch_embed_kernel(p_ref, w_ref, b_ref, o_ref):
    # p_ref: [TM, K] bf16 patches, w_ref: [K, E_pad] bf16, b_ref: [1, E_pad] f32
    acc = jnp.dot(p_ref[...], w_ref[...], preferred_element_type=jnp.float32)
    o_ref[...] = (acc + b_ref[...]).astype(o_ref.dtype)


def patch_embed_forward(x, weight, bias, patch_size):
    """x: [B, C, H, W] (NCHW, like PyTorch). weight: [E, C, P, P], bias: [E].

    Returns [B, num_patches, E], matching proj(x).flatten(2).transpose(1, 2).
    """
    B, C, H, W = x.shape
    P = patch_size
    GH, GW = H // P, W // P
    E = weight.shape[0]
    num_patches = GH * GW
    K = C * P * P
    M = B * num_patches
    out_dtype = x.dtype
    out_bytes = jnp.dtype(out_dtype).itemsize

    # --- layout glue (XLA; fusible into the kernel prologue) ---------------
    # Cast to bf16 first so the transpose pass also moves half the bytes.
    xb = x.astype(jnp.bfloat16)
    patches = (
        xb.reshape(B, C, GH, P, GW, P)
          .transpose(0, 2, 4, 1, 3, 5)          # [B, GH, GW, C, P, P]
          .reshape(M, K)                        # row-major over (gh, gw)
    )
    w2 = weight.reshape(E, K).T.astype(jnp.bfloat16)   # [K, E]
    b2 = bias.reshape(1, E).astype(jnp.float32)        # [1, E]

    # Lane-dense output: pad E to a multiple of 128 (no-op for E % 128 == 0).
    E_pad = _round_up(E, 128)
    if E_pad != E:
        w2 = jnp.pad(w2, ((0, 0), (0, E_pad - E)))
        b2 = jnp.pad(b2, ((0, 0), (0, E_pad - E)))

    TM = _choose_tm(M, K, E_pad, in_bytes=2, out_bytes=out_bytes)
    grid_m = pl.cdiv(M, TM)

    cost = pl.CostEstimate(
        flops=2 * M * K * E_pad,
        transcendentals=0,
        bytes_accessed=(patches.size * patches.dtype.itemsize
                        + w2.size * w2.dtype.itemsize
                        + b2.size * b2.dtype.itemsize
                        + M * E_pad * out_bytes),
    )

    out = pl.pallas_call(
        _patch_embed_kernel,
        out_shape=jax.ShapeDtypeStruct((M, E_pad), out_dtype),
        grid_spec=pl.GridSpec(
            grid=(grid_m,),
            in_specs=[
                pl.BlockSpec((TM, K), lambda i: (i, 0)),      # streamed over M
                pl.BlockSpec((K, E_pad), lambda i: (0, 0)),   # resident weight
                pl.BlockSpec((1, E_pad), lambda i: (0, 0)),   # resident bias
            ],
            out_specs=pl.BlockSpec((TM, E_pad), lambda i: (i, 0)),
        ),
        compiler_params=pltpu.CompilerParams(
            dimension_semantics=("parallel",),       # megacore-shard M on v7x
            vmem_limit_bytes=32 << 20,               # safe on v5e/v6e/v7x
            allow_input_fusion=[True, False, False],  # fuse patch transpose
        ),
        cost_estimate=cost,
    )(patches, w2, b2)

    if E_pad != E:
        out = out[:, :E]
    # flatten(2).transpose(1, 2) equivalent: [B, num_patches, E]
    return out.reshape(B, num_patches, E)


if __name__ == "__main__":
    # Small shapes consistent with the module: img_size=16, patch_size=4,
    # in_chans=4, embed_dim=32, batch=2  -> num_patches = 16, K = 64.
    B, C, IMG, P, E = 2, 4, 16, 4, 32

    key = jax.random.PRNGKey(0)
    kx, kw, kb = jax.random.split(key, 3)
    x = jax.random.normal(kx, (B, C, IMG, IMG), dtype=jnp.float32)
    fan_in = C * P * P
    weight = jax.random.normal(kw, (E, C, P, P), dtype=jnp.float32) / jnp.sqrt(fan_in)
    bias = jax.random.normal(kb, (E,), dtype=jnp.float32) * 0.01

    fwd = jax.jit(patch_embed_forward, static_argnums=3)
    out = jax.block_until_ready(fwd(x, weight, bias, P))

    # Reference: Conv2d(kernel=stride=P) + flatten(2).transpose(1, 2), with
    # inputs rounded through bf16 to mirror the kernel's MXU input precision
    # (accumulation is f32 in both paths).
    xq = x.astype(jnp.bfloat16).astype(jnp.float32)
    wq = weight.astype(jnp.bfloat16).astype(jnp.float32)
    ref = jax.lax.conv_general_dilated(
        xq, wq, window_strides=(P, P), padding="VALID",
        dimension_numbers=("NCHW", "OIHW", "NCHW"),
        precision=jax.lax.Precision.HIGHEST,
    ) + bias.reshape(1, E, 1, 1)
    ref = ref.reshape(B, E, -1).transpose(0, 2, 1)

    assert out.shape == (B, (IMG // P) ** 2, E)
    assert jnp.allclose(out, ref, atol=2e-3, rtol=2e-3), float(
        jnp.max(jnp.abs(out - ref)))
    print("KERNEL_OK")
</pallas_src>

<mosaic_0001>
module attributes {stable_mosaic.version = 11 : i64} {
  func.func @_patch_embed_kernel(%arg0: i32, %arg1: memref<32x64xbf16, #tpu.memory_space<vmem>>, %arg2: memref<64x128xbf16, #tpu.memory_space<vmem>>, %arg3: memref<1x128xf32, #tpu.memory_space<vmem>>, %arg4: memref<32x128xf32, #tpu.memory_space<vmem>>) attributes {dimension_semantics = [#tpu.dimension_semantics<parallel>], iteration_bounds = array<i64: 1>, scalar_prefetch = 0 : i64, scratch_operands = 0 : i64, tpu.core_type = #tpu.core_type<tc>, window_params = [{transform_indices = @transform_0, window_bounds = array<i64: 32, 64>}, {pipeline_mode = #tpu.pipeline_mode<synchronous>, transform_indices = @transform_1, window_bounds = array<i64: 64, 128>}, {pipeline_mode = #tpu.pipeline_mode<synchronous>, transform_indices = @transform_2, window_bounds = array<i64: 1, 128>}, {transform_indices = @transform_3, window_bounds = array<i64: 32, 128>}]} {
    %c0 = arith.constant 0 : index
    %c0_0 = arith.constant 0 : index
    %0 = vector.load %arg1[%c0, %c0_0] : memref<32x64xbf16, #tpu.memory_space<vmem>>, vector<32x64xbf16>
    %c0_1 = arith.constant 0 : index
    %c0_2 = arith.constant 0 : index
    %1 = vector.load %arg2[%c0_1, %c0_2] : memref<64x128xbf16, #tpu.memory_space<vmem>>, vector<64x128xbf16>
    %cst = arith.constant dense<0.000000e+00> : vector<32x128xf32>
    %2 = tpu.matmul %0, %1, %cst {dimension_numbers = #tpu.dot_dimension_numbers<[1], [0], [0], [1], [0, 0, 1, 1], [], []>} : vector<32x64xbf16>, vector<64x128xbf16>, vector<32x128xf32> -> vector<32x128xf32>
    %c0_3 = arith.constant 0 : index
    %c0_4 = arith.constant 0 : index
    %3 = vector.load %arg3[%c0_3, %c0_4] : memref<1x128xf32, #tpu.memory_space<vmem>>, vector<1x128xf32>
    %4 = vector.broadcast %3 : vector<1x128xf32> to vector<32x128xf32>
    %5 = arith.addf %2, %4 : vector<32x128xf32>
    %c0_5 = arith.constant 0 : index
    %c0_6 = arith.constant 0 : index
    %6 = vector.load %arg4[%c0_5, %c0_6] : memref<32x128xf32, #tpu.memory_space<vmem>>, vector<32x128xf32>
    tpu.vector_store %arg4[%c0_5, %c0_6], %5 {strides = array<i32>} : memref<32x128xf32, #tpu.memory_space<vmem>>, vector<32x128xf32>,
    return
  }
  func.func @transform_0(%arg0: i32) -> (i32, i32) {
    %c0_i32 = arith.constant 0 : i32
    %c0_i32_0 = arith.constant 0 : i32
    return %arg0, %c0_i32 : i32, i32
  }
  func.func @transform_1(%arg0: i32) -> (i32, i32) {
    %c0_i32 = arith.constant 0 : i32
    %c0_i32_0 = arith.constant 0 : i32
    %c0_i32_1 = arith.constant 0 : i32
    return %c0_i32, %c0_i32_0 : i32, i32
  }
  func.func @transform_2(%arg0: i32) -> (i32, i32) {
    %c0_i32 = arith.constant 0 : i32
    %c0_i32_0 = arith.constant 0 : i32
    %c0_i32_1 = arith.constant 0 : i32
    return %c0_i32, %c0_i32_0 : i32, i32
  }
  func.func @transform_3(%arg0: i32) -> (i32, i32) {
    %c0_i32 = arith.constant 0 : i32
    %c0_i32_0 = arith.constant 0 : i32
    return %arg0, %c0_i32 : i32, i32
  }
}

</mosaic_0001>

<llo_original>
// kernel: patch_embed_forward.1
$region0: #{patch_embed_forward.1}
  #allocation0 [shape = 'u32[]', space=smem, size = 0x4, offset = 0x4, fixed_abs, tag = 'smem constant byte address 0x4 - core index']
  #allocation1 [shape = 'u32[144,128]{1,0:T(1,128)}', space=vmem, size = 0x12000, scoped, tag = 'internal scratch']
  %s0 = inlined_call_operand.vmem [shape: bf16[32,64], index: 0, kind: input, shape index: {}]
  %s1 = inlined_call_operand.vmem [shape: bf16[64,128], index: 1, kind: input, shape index: {}]
  %s2 = inlined_call_operand.vmem [shape: f32[1,128], index: 2, kind: input, shape index: {}]
  %s3 = inlined_call_operand.hbm [shape: f32[32,128], index: 3, kind: output, shape index: {}]
  %s4 = sld [smem:[#allocation0]]
  $region22: #{patch_embed_forward.1} parent=0
    _
  %s6 = ssub.s32 1, %s4
  %s7 = scalar_select 0, %s6, %s4
  $region1: #{patch_embed_forward.1} parent=0
    #allocation2 [shape = 'u8[16384]{0}', space=vmem, size = 0x4000, scoped, tag = 'output window, operand 0, single buffered']
    #allocation3 [shape = 's32[1]{0}', space=sflag, size = 0x4, scoped, tag = 'scoped memory for patch_embed_forward.1']
    %8 = vsyncpa [#allocation3], 0
    // Predicated region
    $region2: #{patch_embed_forward.1} parent=1 // pred_check
      _
    $region3: #{patch_embed_forward.1} parent=1 // pred_check_branch
      %10 = sbr.rel (0) target = $region5
    $region4: #{patch_embed_forward.1} parent=1 // pred_region
      _
    $region5: #{patch_embed_forward.1} parent=1 // pred_fallthru
      _
    // Predicated region
    $region6: #{patch_embed_forward.1} parent=1 // pred_check
      _
    $region7: #{patch_embed_forward.1} parent=1 // pred_check_branch
      %12 = sbr.rel (0) target = $region9
    $region8: #{patch_embed_forward.1} parent=1 // pred_region
      _
    $region9: #{patch_embed_forward.1} parent=1 // pred_fallthru
      _
    // Predicated region
    $region10: #{patch_embed_forward.1} parent=1 // pred_check
      _
    $region11: #{patch_embed_forward.1} parent=1 // pred_check_branch
      %14 = sbr.rel (0) target = $region13
    $region12: #{patch_embed_forward.1} parent=1 // pred_region
      _
    $region13: #{patch_embed_forward.1} parent=1 // pred_fallthru
      _
    %v16 = vld [vmem:[%s0] sm:$0xf]
    %v17 = vld [vmem:[%s0 + $0x4] sm:$0xf]
    %v18 = vld [vmem:[%s0 + $0x8] sm:$0xf]
    %v19 = vld [vmem:[%s0 + $0xc] sm:$0xf]
    %v20 = vld [vmem:[%s1] sm:$0xf]
    %v21 = vld [vmem:[%s1 + $0x4] sm:$0xf]
    %v22 = vld [vmem:[%s1 + $0x8] sm:$0xf]
    %v23 = vld [vmem:[%s1 + $0xc] sm:$0xf]
    %v24 = vld [vmem:[%s1 + $0x10] sm:$0xf]
    %v25 = vld [vmem:[%s1 + $0x14] sm:$0xf]
    %v26 = vld [vmem:[%s1 + $0x18] sm:$0xf]
    %v27 = vld [vmem:[%s1 + $0x1c] sm:$0xf]
    %v28 = vld [vmem:[%s2] sm:$0x1]
    %v30 = vlaneseq
    %v31 = vshrl.u32 %v30, 7
    %v32 = vsub.s32 0, %v31
    %v33 = vrot.slane %v28, %v32
    %v39 = vunpack.c.l.b16 %v16
    %v40 = vunpack.c.l.b16 %v17
    %v41 = vunpack.c.l.b16 %v18
    %v42 = vunpack.c.l.b16 %v19
    %v43 = vpack.c.b16 %v40, %v39
    %v44 = vpack.c.b16 %v42, %v41
    %v53 = vunpack.c.l.b16 %v20
    %v54 = vunpack.c.l.b16 %v21
    %v55 = vunpack.c.l.b16 %v22
    %v56 = vunpack.c.l.b16 %v23
    %v57 = vunpack.c.l.b16 %v24
    %v58 = vunpack.c.l.b16 %v25
    %v59 = vunpack.c.l.b16 %v26
    %v60 = vunpack.c.l.b16 %v27
    %v61 = vpack.c.b16 %v54, %v53
    %v62 = vpack.c.b16 %v56, %v55
    %v63 = vpack.c.b16 %v58, %v57
    %v64 = vpack.c.b16 %v60, %v59
    %vm69 = vcmask 523264
    %v71 = vsel %vm69, %v43, 0
    %v74 = vsel %vm69, %v44, 0
    %76 = vmatprep.subr.bf16.mxu0 0
    %77 = vmatpush1.bf16.msra.mxu0 0
    %78 = vmatprep.subr.bf16.mxu0 0
    %79 = vmatpush1.bf16.msra.mxu0 0
    %80 = vmatprep.subr.bf16.mxu0 0
    %81 = vmatpush1.bf16.msra.mxu0 0
    %82 = vmatprep.subr.bf16.mxu0 0
    %83 = vmatpush1.bf16.msra.mxu0 0
    %84 = vmatprep.subr.bf16.mxu0 0
    %85 = vmatpush1.bf16.msra.mxu0 %v64
    %86 = vmatprep.subr.bf16.mxu0 0
    %87 = vmatpush1.bf16.msra.mxu0 %v63
    %88 = vmatprep.subr.bf16.mxu0 0
    %89 = vmatpush1.bf16.msra.mxu0 %v62
    %90 = vmatprep.subr.bf16.mxu0 0
    %91 = vmatpush1.bf16.msra.mxu0 %v61
    %92 = vmatprep.subr.bf16.mxu0 0
    %93 = vmatpush2.bf16.msra.mxu0 0
    %94 = vmatprep.subr.bf16.mxu0 0
    %95 = vmatpush2.bf16.msra.mxu0 0
    %96 = vmatprep.subr.bf16.mxu0 0
    %97 = vmatpush2.bf16.msra.mxu0 0
    %98 = vmatprep.subr.bf16.mxu0 0
    %99 = vmatpush2.bf16.msra.mxu0 0
    %100 = vmatprep.subr.bf16.mxu0 0
    %101 = vmatpush2.bf16.msra.mxu0 0
    %102 = vmatprep.subr.bf16.mxu0 0
    %103 = vmatpush2.bf16.msra.mxu0 0
    %104 = vmatprep.subr.bf16.mxu0 0
    %105 = vmatpush2.bf16.msra.mxu0 0
    %106 = vmatprep.subr.bf16.mxu0 0
    %107 = vmatpush2.bf16.msra.mxu0 0
    %108 = vmatprep.mubr.bf16.mxu0 0
    %109 = vmatmul.mubr.bf16.gmra.mxu0 %v71
    %v110 = vpop.f32.mrf.mxu0
    %v111 = vadd.f32 %v33, %v110
    %v112 = vpop.f32.mrf.mxu0
    %v113 = vpop.f32.mrf.mxu0
    %v114 = vadd.f32 %v33, %v113
    %v115 = vpop.f32.mrf.mxu0
    %116 = vmatprep.mubr.bf16.mxu0 0
    %117 = vmatmul.mubr.bf16.gmra.mxu0 %v74
    %v118 = vpop.f32.mrf.mxu0
    %v119 = vadd.f32 %v33, %v118
    %v120 = vpop.f32.mrf.mxu0
    %v121 = vpop.f32.mrf.mxu0
    %v122 = vadd.f32 %v33, %v121
    %v123 = vpop.f32.mrf.mxu0
    %124 = vdwg.mxu0
    %125 = vst [vmem:[#allocation2] sm:$0xff] %v111
    %126 = vst [vmem:[#allocation2 + $0x8] sm:$0xff] %v114
    %127 = vst [vmem:[#allocation2 + $0x10] sm:$0xff] %v119
    %128 = vst [vmem:[#allocation2 + $0x18] sm:$0xff] %v122
    // Predicated region
    $region14: #{patch_embed_forward.1} parent=1 // pred_check
      _
    $region15: #{patch_embed_forward.1} parent=1 // pred_check_branch
      %130 = sbr.rel (0) target = $region17
    $region16: #{patch_embed_forward.1} parent=1 // pred_region
      %s132 = ssub.s32 512, 512
      %133 = vsyncadd [#allocation3], %s132
      %s134 = sshll.u32 [#allocation2], 4
      %s135 = int_to_ptr.vmem [resolvable:$true] %s134
      %140 = dma.vmem_to_hbm [thread:$0]  %s135, 512, %s3, [#allocation3], 128, 128, 8
    $region17: #{patch_embed_forward.1} parent=1 // pred_fallthru
      _
    // Predicated region
    $region18: #{patch_embed_forward.1} parent=1 // pred_check
      _
    $region19: #{patch_embed_forward.1} parent=1 // pred_check_branch
      %142 = sbr.rel (0) target = $region21
    $region20: #{patch_embed_forward.1} parent=1 // pred_region
      %143 = dma.done [#allocation3], 512
    $region21: #{patch_embed_forward.1} parent=1 // pred_fallthru
      _
    %144 = vsyncpa [#allocation3], 1

</llo_original>
